<compile_context>
chip_gen: v5e
topology: v5e:2x2
jax: 0.10.0
libtpu: 0.0.40
codegen_flags: <defaults>
</compile_context>

<pallas_src>
import jax
import jax.numpy as jnp
from jax import lax
from jax.experimental import pallas as pl
from jax.experimental.pallas import tpu as pltpu


def _self_expression_kernel(coef_ref, x_ref, xrec_ref, coef_out_ref):
    """Grid step (i, j, k):
       - zero-init the resident x_rec block at k == 0,
       - write the coef tile to coef_out (diagonal-zeroed iff i == k),
       - accumulate coef_out_tile @ x_tile directly into xrec_ref (f32).
    """
    i = pl.program_id(0)   # row-block of coef / x_rec
    k = pl.program_id(2)   # reduction axis (col-block of coef == row-block of x)

    tm, tk = coef_ref.shape

    @pl.when(k == 0)
    def _():
        xrec_ref[...] = jnp.zeros_like(xrec_ref)

    c = coef_ref[...]

    # tm == tk by construction, so the tile overlaps the global diagonal
    # iff its block row equals its block column.
    is_diag = i == k

    @pl.when(is_diag)
    def _():
        eye = (lax.broadcasted_iota(jnp.int32, (tm, tk), 0)
               == lax.broadcasted_iota(jnp.int32, (tm, tk), 1))
        coef_out_ref[...] = jnp.where(eye, jnp.zeros_like(c), c)

    @pl.when(jnp.logical_not(is_diag))
    def _():
        coef_out_ref[...] = c

    # Single MXU op in static code; LHS is the just-committed (masked) tile.
    xrec_ref[...] += jnp.dot(coef_out_ref[...], x_ref[...],
                             preferred_element_type=jnp.float32)


def _round_up(v, m):
    return ((v + m - 1) // m) * m


def _largest_tile(dim, cap):
    """Largest multiple of 128 <= cap that divides dim (dim is a multiple of 128)."""
    t = cap
    while t >= 128:
        if dim % t == 0:
            return t
        t -= 128
    return 128


_TILE_MN_CAP = 512   # tm / tk cap (multiple of 128; good for 256x256 MXU)
_TILE_N_CAP = 512    # tn cap: when d <= cap, j extent == 1 -> single coef pass


@jax.jit
def fea_self_expression_forward(coef, x):
    """Returns (x_rec, coef_zero_diag) matching the PyTorch forward."""
    n, n2 = coef.shape
    assert n == n2, "coef must be square"
    n_x, d = x.shape
    assert n_x == n, "x rows must equal n_samples"

    # ---- tile selection (shapes are static under jit) ----
    if n <= _TILE_MN_CAP:
        n_pad = n
        tm = tk = n                       # full extent (valid: block == full dim)
    else:
        n_pad = _round_up(n, 128)
        tm = tk = _largest_tile(n_pad, _TILE_MN_CAP)

    if d <= _TILE_N_CAP:
        d_pad = d
        tn = d                            # single j pass: coef streamed once
    else:
        d_pad = _round_up(d, 128)
        tn = _largest_tile(d_pad, _TILE_N_CAP)

    # ---- zero-pad non-conforming shapes (padded rows/cols contribute 0) ----
    coef_p = coef
    x_p = x
    if n_pad != n:
        coef_p = jnp.pad(coef, ((0, n_pad - n), (0, n_pad - n)))
        x_p = jnp.pad(x, ((0, n_pad - n), (0, 0)))
    if d_pad != d:
        x_p = jnp.pad(x_p, ((0, 0), (0, d_pad - d)))

    grid = (n_pad // tm, d_pad // tn, n_pad // tk)

    # ---- advisory cost estimate (helps XLA schedule around this call) ----
    j_passes = d_pad // tn          # how many times coef is read / coef_out written
    i_passes = n_pad // tm          # how many times x is read
    flops = 2 * n_pad * n_pad * d_pad
    bytes_accessed = (
        2 * (n_pad * n_pad * 4) * j_passes   # coef read + coef_out write per j pass
        + (n_pad * d_pad * 4) * i_passes     # x reads
        + (n_pad * d_pad * 4)                # x_rec write
    )
    cost = pl.CostEstimate(flops=flops, transcendentals=0,
                           bytes_accessed=bytes_accessed)

    xrec_p, coef_out_p = pl.pallas_call(
        _self_expression_kernel,
        out_shape=(
            jax.ShapeDtypeStruct((n_pad, d_pad), jnp.float32),   # x_rec (f32 accumulate)
            jax.ShapeDtypeStruct((n_pad, n_pad), coef.dtype),    # coef with zero diag
        ),
        grid_spec=pltpu.PrefetchScalarGridSpec(
            num_scalar_prefetch=0,
            grid=grid,
            in_specs=[
                pl.BlockSpec((tm, tk), lambda i, j, k: (i, k)),  # coef
                pl.BlockSpec((tk, tn), lambda i, j, k: (k, j)),  # x
            ],
            out_specs=[
                pl.BlockSpec((tm, tn), lambda i, j, k: (i, j)),  # x_rec (accumulator)
                pl.BlockSpec((tm, tk), lambda i, j, k: (i, k)),  # coef (masked)
            ],
        ),
        compiler_params=pltpu.CompilerParams(
            # j kept "arbitrary" so v7x's two TCs never duplicate coef_out writes
            # when j extent > 1; k is the reduction axis (resident x_rec block).
            dimension_semantics=("parallel", "arbitrary", "arbitrary")),
        cost_estimate=cost,
    )(coef_p, x_p)

    xrec = xrec_p[:n, :d].astype(x.dtype)
    coef_out = coef_out_p[:n, :n]
    return xrec, coef_out


if __name__ == "__main__":
    # Module __init__: coef = 0.0001 * ones(n_samples, n_samples)
    n_samples = 8
    d_feature = 32

    coef = 0.0001 * jnp.ones((n_samples, n_samples), dtype=jnp.float32)

    key = jax.random.PRNGKey(0)
    x = jax.random.normal(key, (n_samples, d_feature), dtype=jnp.float32)

    x_rec, coef_out = fea_self_expression_forward(coef, x)
    jax.block_until_ready((x_rec, coef_out))

    # Reference check in plain JAX.
    coef_ref = coef - jnp.diag(jnp.diag(coef))
    x_rec_ref = coef_ref @ x
    assert coef_out.shape == (n_samples, n_samples)
    assert x_rec.shape == (n_samples, d_feature)
    assert jnp.allclose(coef_out, coef_ref, atol=1e-6), "coef mismatch"
    assert jnp.allclose(x_rec, x_rec_ref, atol=1e-5, rtol=1e-5), "x_rec mismatch"

    print("KERNEL_OK")
</pallas_src>

<mosaic_0001>
module attributes {stable_mosaic.version = 11 : i64} {
  func.func @_self_expression_kernel(%arg0: i32, %arg1: i32, %arg2: i32, %arg3: memref<8x8xf32, #tpu.memory_space<vmem>>, %arg4: memref<8x32xf32, #tpu.memory_space<vmem>>, %arg5: memref<8x32xf32, #tpu.memory_space<vmem>>, %arg6: memref<8x8xf32, #tpu.memory_space<vmem>>) attributes {dimension_semantics = [#tpu.dimension_semantics<parallel>, #tpu.dimension_semantics<arbitrary>, #tpu.dimension_semantics<arbitrary>], iteration_bounds = array<i64: 1, 1, 1>, scalar_prefetch = 0 : i64, scratch_operands = 0 : i64, tpu.core_type = #tpu.core_type<tc>, window_params = [{transform_indices = @transform_0, window_bounds = array<i64: 8, 8>}, {transform_indices = @transform_1, window_bounds = array<i64: 8, 32>}, {transform_indices = @transform_2, window_bounds = array<i64: 8, 32>}, {transform_indices = @transform_3, window_bounds = array<i64: 8, 8>}]} {
    %c0_i32 = arith.constant 0 : i32
    %0 = arith.cmpi eq, %arg2, %c0_i32 : i32
    %1 = arith.extui %0 : i1 to i32
    %c0_i32_0 = arith.constant 0 : i32
    %2 = arith.cmpi ne, %1, %c0_i32_0 : i32
    scf.if %2 {
      %cst_12 = arith.constant 0.000000e+00 : f32
      %16 = vector.broadcast %cst_12 : f32 to vector<8x32xf32>
      %c0_13 = arith.constant 0 : index
      %c0_14 = arith.constant 0 : index
      %17 = vector.load %arg5[%c0_13, %c0_14] : memref<8x32xf32, #tpu.memory_space<vmem>>, vector<8x32xf32>
      tpu.vector_store %arg5[%c0_13, %c0_14], %16 {strides = array<i32>} : memref<8x32xf32, #tpu.memory_space<vmem>>, vector<8x32xf32>,
    } else {
    }
    %c0 = arith.constant 0 : index
    %c0_1 = arith.constant 0 : index
    %3 = vector.load %arg3[%c0, %c0_1] : memref<8x8xf32, #tpu.memory_space<vmem>>, vector<8x8xf32>
    %4 = arith.cmpi eq, %arg0, %arg2 : i32
    %5 = arith.extui %4 : i1 to i32
    %c0_i32_2 = arith.constant 0 : i32
    %6 = arith.cmpi ne, %5, %c0_i32_2 : i32
    scf.if %6 {
      %16 = tpu.iota {dimensions = array<i32: 0>} : vector<8x8xi32>
      %17 = tpu.iota {dimensions = array<i32: 1>} : vector<8x8xi32>
      %18 = arith.cmpi eq, %16, %17 : vector<8x8xi32>
      %cst_12 = arith.constant 0.000000e+00 : f32
      %19 = vector.broadcast %cst_12 : f32 to vector<8x8xf32>
      %20 = arith.select %18, %19, %3 : vector<8x8xi1>, vector<8x8xf32>
      %c0_13 = arith.constant 0 : index
      %c0_14 = arith.constant 0 : index
      %21 = vector.load %arg6[%c0_13, %c0_14] : memref<8x8xf32, #tpu.memory_space<vmem>>, vector<8x8xf32>
      tpu.vector_store %arg6[%c0_13, %c0_14], %20 {strides = array<i32>} : memref<8x8xf32, #tpu.memory_space<vmem>>, vector<8x8xf32>,
    } else {
    }
    %true = arith.constant true
    %7 = arith.xori %4, %true : i1
    %8 = arith.extui %7 : i1 to i32
    %c0_i32_3 = arith.constant 0 : i32
    %9 = arith.cmpi ne, %8, %c0_i32_3 : i32
    scf.if %9 {
      %c0_12 = arith.constant 0 : index
      %c0_13 = arith.constant 0 : index
      %16 = vector.load %arg6[%c0_12, %c0_13] : memref<8x8xf32, #tpu.memory_space<vmem>>, vector<8x8xf32>
      tpu.vector_store %arg6[%c0_12, %c0_13], %3 {strides = array<i32>} : memref<8x8xf32, #tpu.memory_space<vmem>>, vector<8x8xf32>,
    } else {
    }
    %c0_4 = arith.constant 0 : index
    %c0_5 = arith.constant 0 : index
    %10 = vector.load %arg5[%c0_4, %c0_5] : memref<8x32xf32, #tpu.memory_space<vmem>>, vector<8x32xf32>
    %c0_6 = arith.constant 0 : index
    %c0_7 = arith.constant 0 : index
    %11 = vector.load %arg6[%c0_6, %c0_7] : memref<8x8xf32, #tpu.memory_space<vmem>>, vector<8x8xf32>
    %c0_8 = arith.constant 0 : index
    %c0_9 = arith.constant 0 : index
    %12 = vector.load %arg4[%c0_8, %c0_9] : memref<8x32xf32, #tpu.memory_space<vmem>>, vector<8x32xf32>
    %cst = arith.constant dense<0.000000e+00> : vector<8x32xf32>
    %13 = tpu.matmul %11, %12, %cst {dimension_numbers = #tpu.dot_dimension_numbers<[1], [0], [0], [1], [0, 0, 1, 1], [], []>} : vector<8x8xf32>, vector<8x32xf32>, vector<8x32xf32> -> vector<8x32xf32>
    %14 = arith.addf %10, %13 : vector<8x32xf32>
    %c0_10 = arith.constant 0 : index
    %c0_11 = arith.constant 0 : index
    %15 = vector.load %arg5[%c0_10, %c0_11] : memref<8x32xf32, #tpu.memory_space<vmem>>, vector<8x32xf32>
    tpu.vector_store %arg5[%c0_10, %c0_11], %14 {strides = array<i32>} : memref<8x32xf32, #tpu.memory_space<vmem>>, vector<8x32xf32>,
    return
  }
  func.func @transform_0(%arg0: i32, %arg1: i32, %arg2: i32) -> (i32, i32) {
    %c0_i32 = arith.constant 0 : i32
    return %arg0, %arg2 : i32, i32
  }
  func.func @transform_1(%arg0: i32, %arg1: i32, %arg2: i32) -> (i32, i32) {
    %c0_i32 = arith.constant 0 : i32
    return %arg2, %arg1 : i32, i32
  }
  func.func @transform_2(%arg0: i32, %arg1: i32, %arg2: i32) -> (i32, i32) {
    %c0_i32 = arith.constant 0 : i32
    return %arg0, %arg1 : i32, i32
  }
  func.func @transform_3(%arg0: i32, %arg1: i32, %arg2: i32) -> (i32, i32) {
    %c0_i32 = arith.constant 0 : i32
    return %arg0, %arg2 : i32, i32
  }
}

</mosaic_0001>

<llo_original>
// kernel: fea_self_expression_forward.1
$region0: #{fea_self_expression_forward.1}
  #allocation0 [shape = 'u32[]', space=smem, size = 0x4, offset = 0x4, fixed_abs, tag = 'smem constant byte address 0x4 - core index']
  #allocation1 [shape = 'u32[72,128]{1,0:T(1,128)}', space=vmem, size = 0x9000, scoped, tag = 'internal scratch']
  %s0 = inlined_call_operand.hbm [shape: f32[8,8], index: 0, kind: input, shape index: {}]
  %s1 = inlined_call_operand.hbm [shape: f32[8,32], index: 1, kind: input, shape index: {}]
  %s2 = inlined_call_operand.hbm [shape: f32[8,32], index: 2, kind: output, shape index: {0}]
  %s3 = inlined_call_operand.hbm [shape: f32[8,8], index: 3, kind: output, shape index: {1}]
  %4 = xla_tuple %s2, %s3
  %s5 = sld [smem:[#allocation0]]
  $region46: #{fea_self_expression_forward.1} parent=0
    _
  %s7 = ssub.s32 1, %s5
  %s8 = scalar_select 0, %s7, %s5
  $region1: #{fea_self_expression_forward.1} parent=0
    #allocation2 [shape = 'u8[4096]{0}', space=vmem, size = 0x1000, scoped, tag = 'input window, operand 0, single buffered']
    #allocation3 [shape = 's32[1]{0}', space=sflag, size = 0x4, scoped, tag = 'scoped memory for fea_self_expression_forward.1']
    #allocation4 [shape = 's32[1]{0}', space=sflag, size = 0x4, scoped, tag = 'scoped memory for fea_self_expression_forward.1']
    #allocation5 [shape = 'u8[4096]{0}', space=vmem, size = 0x1000, scoped, tag = 'input window, operand 1, single buffered']
    #allocation6 [shape = 's32[1]{0}', space=sflag, size = 0x4, scoped, tag = 'scoped memory for fea_self_expression_forward.1']
    #allocation7 [shape = 'u8[4096]{0}', space=vmem, size = 0x1000, scoped, tag = 'output window, operand 0, single buffered']
    #allocation8 [shape = 'u8[4096]{0}', space=vmem, size = 0x1000, scoped, tag = 'output window, operand 1, single buffered']
    #allocation9 [shape = 's32[1]{0}', space=sflag, size = 0x4, scoped, tag = 'scoped memory for fea_self_expression_forward.1']
    %9 = vsyncpa [#allocation3], 0
    %10 = vsyncpa [#allocation6], 0
    %11 = vsyncpa [#allocation4], 0
    %12 = vsyncpa [#allocation9], 0
    // Predicated region
    $region2: #{fea_self_expression_forward.1} parent=1 // pred_check
      _
    $region3: #{fea_self_expression_forward.1} parent=1 // pred_check_branch
      %14 = sbr.rel (0) target = $region5
    $region4: #{fea_self_expression_forward.1} parent=1 // pred_region
      %16 = vsyncadd [#allocation3], 0
      %s18 = sshll.u32 %s0, 4
      %s19 = int_to_ptr.hbm [resolvable:$true] %s18
      %s20 = sshll.u32 [#allocation2], 4
      %s21 = int_to_ptr.vmem [resolvable:$true] %s20
      %23 = dma.hbm_to_vmem [thread:$0]  %s19, 128, %s21, [#allocation3]
    $region5: #{fea_self_expression_forward.1} parent=1 // pred_fallthru
      _
    // Predicated region
    $region6: #{fea_self_expression_forward.1} parent=1 // pred_check
      _
    $region7: #{fea_self_expression_forward.1} parent=1 // pred_check_branch
      %25 = sbr.rel (0) target = $region9
    $region8: #{fea_self_expression_forward.1} parent=1 // pred_region
      %27 = vsyncadd [#allocation6], 0
      %s29 = sshll.u32 %s1, 4
      %s30 = int_to_ptr.hbm [resolvable:$true] %s29
      %s31 = sshll.u32 [#allocation5], 4
      %s32 = int_to_ptr.vmem [resolvable:$true] %s31
      %34 = dma.hbm_to_vmem [thread:$0]  %s30, 128, %s32, [#allocation6]
    $region9: #{fea_self_expression_forward.1} parent=1 // pred_fallthru
      _
    // Predicated region
    $region10: #{fea_self_expression_forward.1} parent=1 // pred_check
      _
    $region11: #{fea_self_expression_forward.1} parent=1 // pred_check_branch
      %36 = sbr.rel (0) target = $region13
    $region12: #{fea_self_expression_forward.1} parent=1 // pred_region
      %38 = dma.done [#allocation3], 128
    $region13: #{fea_self_expression_forward.1} parent=1 // pred_fallthru
      _
    // Predicated region
    $region14: #{fea_self_expression_forward.1} parent=1 // pred_check
      _
    $region15: #{fea_self_expression_forward.1} parent=1 // pred_check_branch
      %40 = sbr.rel (0) target = $region17
    $region16: #{fea_self_expression_forward.1} parent=1 // pred_region
      %42 = dma.done [#allocation6], 128
    $region17: #{fea_self_expression_forward.1} parent=1 // pred_fallthru
      _
    %p43 = scmp.eq.s32.totalorder 0, 0
    // Predicated region
    $region18: #{fea_self_expression_forward.1} parent=1 // pred_check
      %p44 = pneg %p43
    $region19: #{fea_self_expression_forward.1} parent=1 // pred_check_branch
      %46 = sbr.rel (%p44) target = $region21
    $region20: #{fea_self_expression_forward.1} parent=1 // pred_region
      %vm47 = vcmask 261120
      %48 = vst.msk [vmem:[#allocation7] sm:$0xff] %vm47, 0.0
    $region21: #{fea_self_expression_forward.1} parent=1 // pred_fallthru
      _
    %v49 = vld [vmem:[#allocation2] sm:$0xff]
    %p50 = scmp.eq.s32.totalorder 0, 0
    // Predicated region
    $region22: #{fea_self_expression_forward.1} parent=1 // pred_check
      %p51 = pneg %p50
    $region23: #{fea_self_expression_forward.1} parent=1 // pred_check_branch
      %53 = sbr.rel (%p51) target = $region25
    $region24: #{fea_self_expression_forward.1} parent=1 // pred_region
      %v54 = vlaneseq
      %v55 = vshrl.u32 %v54, 7
      %v56 = vlaneseq
      %v57 = vand.u32 %v56, 127
      %vm58 = vcmp.eq.s32.totalorder %v55, %v57
      %v59 = vsel %vm58, 0.0, %v49
      %vm60 = vcmask 64512
      %61 = vst.msk [vmem:[#allocation8] sm:$0xff] %vm60, %v59
    $region25: #{fea_self_expression_forward.1} parent=1 // pred_fallthru
      _
    %p62 = scmp.ne.s32.totalorder 0, 0
    // Predicated region
    $region26: #{fea_self_expression_forward.1} parent=1 // pred_check
      %p63 = pneg %p62
    $region27: #{fea_self_expression_forward.1} parent=1 // pred_check_branch
      %65 = sbr.rel (%p63) target = $region29
    $region28: #{fea_self_expression_forward.1} parent=1 // pred_region
      %vm66 = vcmask 64512
      %67 = vst.msk [vmem:[#allocation8] sm:$0xff] %vm66, %v49
    $region29: #{fea_self_expression_forward.1} parent=1 // pred_fallthru
      _
    %v68 = vld [vmem:[#allocation7] sm:$0xff]
    %v69 = vld [vmem:[#allocation8] sm:$0xff]
    %v70 = vld [vmem:[#allocation5] sm:$0xff]
    %vm71 = vcmask 64512
    %v73 = vsel %vm71, %v69, 0
    %75 = vmatpush.msra.mxu0 0.0
    %76 = vmatpush.msra.mxu0 0.0
    %77 = vmatpush.msra.mxu0 0.0
    %78 = vmatpush.msra.mxu0 0.0
    %79 = vmatpush.msra.mxu0 0.0
    %80 = vmatpush.msra.mxu0 0.0
    %81 = vmatpush.msra.mxu0 0.0
    %82 = vmatpush.msra.mxu0 0.0
    %83 = vmatpush.msra.mxu0 0.0
    %84 = vmatpush.msra.mxu0 0.0
    %85 = vmatpush.msra.mxu0 0.0
    %86 = vmatpush.msra.mxu0 0.0
    %87 = vmatpush.msra.mxu0 0.0
    %88 = vmatpush.msra.mxu0 0.0
    %89 = vmatpush.msra.mxu0 0.0
    %90 = vmatpush.msra.mxu0 %v70
    %91 = vmatmul.f32.gmra.mxu0 %v73
    %v92 = vpop.f32.mrf.mxu0
    %v93 = vadd.f32 0.0, %v92
    %94 = vdwg.mxu0
    %v95 = vadd.f32 %v68, %v93
    %vm96 = vcmask 261120
    %97 = vst.msk [vmem:[#allocation7] sm:$0xff] %vm96, %v95
    // Predicated region
    $region30: #{fea_self_expression_forward.1} parent=1 // pred_check
      _
    $region31: #{fea_self_expression_forward.1} parent=1 // pred_check_branch
      %99 = sbr.rel (0) target = $region33
    $region32: #{fea_self_expression_forward.1} parent=1 // pred_region
      %101 = vsyncadd [#allocation4], 0
      %s103 = sshll.u32 [#allocation7], 4
      %s104 = int_to_ptr.vmem [resolvable:$true] %s103
      %s105 = sshll.u32 %s2, 4
      %s106 = int_to_ptr.hbm [resolvable:$true] %s105
      %108 = dma.vmem_to_hbm [thread:$0]  %s104, 128, %s106, [#allocation4]
    $region33: #{fea_self_expression_forward.1} parent=1 // pred_fallthru
      _
    // Predicated region
    $region34: #{fea_self_expression_forward.1} parent=1 // pred_check
      _
    $region35: #{fea_self_expression_forward.1} parent=1 // pred_check_branch
      %110 = sbr.rel (0) target = $region37
    $region36: #{fea_self_expression_forward.1} parent=1 // pred_region
      %112 = vsyncadd [#allocation9], 0
      %s114 = sshll.u32 [#allocation8], 4
      %s115 = int_to_ptr.vmem [resolvable:$true] %s114
      %s116 = sshll.u32 %s3, 4
      %s117 = int_to_ptr.hbm [resolvable:$true] %s116
      %119 = dma.vmem_to_hbm [thread:$0]  %s115, 128, %s117, [#allocation9]
    $region37: #{fea_self_expression_forward.1} parent=1 // pred_fallthru
      _
    // Predicated region
    $region38: #{fea_self_expression_forward.1} parent=1 // pred_check
      _
    $region39: #{fea_self_expression_forward.1} parent=1 // pred_check_branch
      %121 = sbr.rel (0) target = $region41
    $region40: #{fea_self_expression_forward.1} parent=1 // pred_region
      %123 = dma.done [#allocation4], 128
    $region41: #{fea_self_expression_forward.1} parent=1 // pred_fallthru
      _
    // Predicated region
    $region42: #{fea_self_expression_forward.1} parent=1 // pred_check
      _
    $region43: #{fea_self_expression_forward.1} parent=1 // pred_check_branch
      %125 = sbr.rel (0) target = $region45
    $region44: #{fea_self_expression_forward.1} parent=1 // pred_region
      %127 = dma.done [#allocation9], 128
    $region45: #{fea_self_expression_forward.1} parent=1 // pred_fallthru
      _
    %128 = vsyncpa [#allocation3], 1
    %129 = vsyncpa [#allocation6], 1
    %130 = vsyncpa [#allocation4], 1
    %131 = vsyncpa [#allocation9], 1

</llo_original>
